<compile_context>
chip_gen: v7x
topology: tpu7x:2x2x1
jax: 0.10.0
libtpu: 0.0.40
codegen_flags: <defaults>
</compile_context>

<pallas_src>
import jax
import jax.numpy as jnp
from jax.experimental import pallas as pl
from jax.experimental.pallas import tpu as pltpu

_LANES = 128
_SUBLANES = 8


def _make_kernel(tr, chunk, valid_rows, inv_total):
    """tr: rows per block; chunk: rows per inner step; valid_rows: real rows."""
    nfull = tr // chunk
    rem = tr - nfull * chunk  # static; multiple of 8 since tr, chunk are

    def _accumulate(out_ref, tgt_ref, acc_ref, base_row, r0, nrows):
        o = out_ref[pl.ds(r0, nrows), :].astype(jnp.float32)
        t = tgt_ref[pl.ds(r0, nrows), :].astype(jnp.float32)
        # global row index of each sublane row -> masks block overhang past the
        # end of the array (garbage reads) as well as the t<=0 case.
        row = base_row + r0 + jax.lax.broadcasted_iota(jnp.int32, (nrows, 1), 0)
        mask = (t > 0) & (row < valid_rows)
        # single log per element (exact division, keeps tolerance)
        pw = jnp.where(mask, t * jnp.log(t / o), 0.0)
        # layout-compatible sublane fold: pure VPU adds, no per-step XLU reduce
        acc_ref[...] += pw.reshape(nrows // _SUBLANES, _SUBLANES, _LANES).sum(axis=0)

    def kernel(out_ref, tgt_ref, loss_ref, acc_ref):
        c = pl.program_id(0)          # core-split axis ("parallel")
        k = pl.program_id(1)          # streaming reduction axis ("arbitrary")
        spc = pl.num_programs(1)

        @pl.when(k == 0)
        def _():
            acc_ref[...] = jnp.zeros_like(acc_ref)

        base_row = (c * spc + k) * tr

        if nfull > 0:
            def body(ci, carry):
                r0 = pl.multiple_of(ci * chunk, chunk)
                _accumulate(out_ref, tgt_ref, acc_ref, base_row, r0, chunk)
                return carry
            jax.lax.fori_loop(0, nfull, body, 0)

        if rem > 0:
            _accumulate(out_ref, tgt_ref, acc_ref, base_row, nfull * chunk, rem)

        # finalize: single cross-lane reduce + scale; one per core-split slot
        @pl.when(k == spc - 1)
        def _():
            loss_ref[...] = jnp.sum(acc_ref[...], keepdims=True) * inv_total

    return kernel


def kl_loss(output, target, *, tile_rows=8192, chunk_rows=512, num_splits=2):
    """Pallas KL divergence loss. output/target: any shape, same shape."""
    assert output.shape == target.shape
    total = output.size
    inv_total = 1.0 / float(total)

    out_flat = output.reshape(-1)   # free (metadata) reshape
    tgt_flat = target.reshape(-1)

    # Rare path only: if the element count is not lane-aligned, pad to the next
    # multiple of 128 (output=1.0 -> log==0, target=0.0 -> masked to 0).
    # Lane-aligned inputs (the common case) take the zero-copy path below.
    if total % _LANES:
        pad = _LANES - total % _LANES
        out_flat = jnp.concatenate([out_flat, jnp.ones((pad,), out_flat.dtype)])
        tgt_flat = jnp.concatenate([tgt_flat, jnp.zeros((pad,), tgt_flat.dtype)])

    rows = out_flat.size // _LANES
    out2d = out_flat.reshape(rows, _LANES)   # free reshape (row-major split)
    tgt2d = tgt_flat.reshape(rows, _LANES)

    # Tile / chunk sizes: multiples of 8 sublanes; tiny inputs shrink the tile.
    tile_rows = max(_SUBLANES, (tile_rows // _SUBLANES) * _SUBLANES)
    chunk_rows = max(_SUBLANES, (chunk_rows // _SUBLANES) * _SUBLANES)
    tr = min(tile_rows, _SUBLANES * pl.cdiv(rows, _SUBLANES))
    chunk = min(chunk_rows, tr)

    num_blocks = pl.cdiv(rows, tr)
    spc = pl.cdiv(num_blocks, num_splits)
    grid = (num_splits, spc)

    def in_map(c, k):
        # clamp so duplicated / overhanging block indices stay in range; the
        # in-kernel row mask zeroes any duplicated or out-of-bounds rows.
        return (jnp.minimum(c * spc + k, num_blocks - 1), 0)

    parts = pl.pallas_call(
        _make_kernel(tr, chunk, rows, inv_total),
        out_shape=jax.ShapeDtypeStruct((num_splits, 1, 1), jnp.float32),
        grid_spec=pltpu.PrefetchScalarGridSpec(
            num_scalar_prefetch=0,
            grid=grid,
            in_specs=[
                pl.BlockSpec((tr, _LANES), in_map),
                pl.BlockSpec((tr, _LANES), in_map),
            ],
            out_specs=pl.BlockSpec((None, 1, 1), lambda c, k: (c, 0, 0)),
            scratch_shapes=[pltpu.VMEM((_SUBLANES, _LANES), jnp.float32)],
        ),
        compiler_params=pltpu.CompilerParams(
            dimension_semantics=("parallel", "arbitrary"),
            vmem_limit_bytes=48 << 20,
        ),
    )(out2d, tgt2d)

    # partials are already scaled by 1/total; sum the (per-core) slots.
    return jnp.sum(parts)


if __name__ == "__main__":
    key = jax.random.PRNGKey(0)
    k1, k2 = jax.random.split(key)

    N, C, H, W = 2, 4, 16, 16  # (N, *) inputs, here 4-D like conv activations

    # build valid probability distributions (positive, sum to 1 over last dim)
    output = jax.nn.softmax(jax.random.normal(k1, (N, C, H, W), jnp.float32), axis=-1)
    target = jax.nn.softmax(jax.random.normal(k2, (N, C, H, W), jnp.float32), axis=-1)

    loss = kl_loss(output, target)
    loss = jax.block_until_ready(loss)

    # plain-JAX reference check (mirrors torch.nn.KLDivLoss(log(output), target))
    pw = jnp.where(target > 0, target * (jnp.log(target) - jnp.log(output)), 0.0)
    ref = jnp.mean(pw)
    assert jnp.allclose(loss, ref, rtol=1e-5, atol=1e-6), (loss, ref)

    print("KERNEL_OK")
</pallas_src>

<mosaic_0001>
module attributes {stable_mosaic.version = 11 : i64} {
  func.func @kernel(%arg0: i32, %arg1: i32, %arg2: memref<16x128xf32, #tpu.memory_space<vmem>>, %arg3: memref<16x128xf32, #tpu.memory_space<vmem>>, %arg4: memref<1x1x1xf32, #tpu.memory_space<vmem>>, %arg5: memref<8x128xf32, #tpu.memory_space<vmem>>) attributes {dimension_semantics = [#tpu.dimension_semantics<parallel>, #tpu.dimension_semantics<arbitrary>], iteration_bounds = array<i64: 2, 1>, scalar_prefetch = 0 : i64, scratch_operands = 1 : i64, tpu.core_type = #tpu.core_type<tc>, window_params = [{transform_indices = @transform_0, window_bounds = array<i64: 16, 128>}, {transform_indices = @transform_1, window_bounds = array<i64: 16, 128>}, {transform_indices = @transform_2, window_bounds = array<i64: 1, 1, 1>}]} {
    %c0_i32 = arith.constant 0 : i32
    %0 = arith.cmpi eq, %arg1, %c0_i32 : i32
    %1 = arith.extui %0 : i1 to i32
    %c0_i32_0 = arith.constant 0 : i32
    %2 = arith.cmpi ne, %1, %c0_i32_0 : i32
    scf.if %2 {
      %cst_14 = arith.constant 0.000000e+00 : f32
      %35 = vector.broadcast %cst_14 : f32 to vector<8x128xf32>
      %c0_15 = arith.constant 0 : index
      %c0_16 = arith.constant 0 : index
      %36 = vector.load %arg5[%c0_15, %c0_16] : memref<8x128xf32, #tpu.memory_space<vmem>>, vector<8x128xf32>
      tpu.vector_store %arg5[%c0_15, %c0_16], %35 {strides = array<i32>} : memref<8x128xf32, #tpu.memory_space<vmem>>, vector<8x128xf32>,
    } else {
    }
    %c1_i32 = arith.constant 1 : i32
    %3 = arith.muli %arg0, %c1_i32 : i32
    %4 = arith.addi %3, %arg1 : i32
    %c16_i32 = arith.constant 16 : i32
    %5 = arith.muli %4, %c16_i32 : i32
    %c0_i32_1 = arith.constant 0 : i32
    %c16_i32_2 = arith.constant 16 : i32
    %6 = arith.muli %c0_i32_1, %c16_i32_2 : i32
    %7 = tpu.assume_multiple %6, 16 : i32
    %8 = arith.index_cast %7 : i32 to index
    %c0 = arith.constant 0 : index
    %9 = vector.load %arg2[%8, %c0] : memref<16x128xf32, #tpu.memory_space<vmem>>, vector<16x128xf32>
    %10 = arith.index_cast %7 : i32 to index
    %c0_3 = arith.constant 0 : index
    %11 = vector.load %arg3[%10, %c0_3] : memref<16x128xf32, #tpu.memory_space<vmem>>, vector<16x128xf32>
    %12 = arith.addi %5, %7 : i32
    %13 = tpu.iota {dimensions = array<i32: 0>} : vector<16x1xi32>
    %14 = vector.broadcast %12 : i32 to vector<16x1xi32>
    %15 = arith.addi %14, %13 : vector<16x1xi32>
    %cst = arith.constant 0.000000e+00 : f32
    %16 = vector.broadcast %cst : f32 to vector<16x128xf32>
    %17 = arith.cmpf ogt, %11, %16 : vector<16x128xf32>
    %c16_i32_4 = arith.constant 16 : i32
    %18 = vector.broadcast %c16_i32_4 : i32 to vector<16x1xi32>
    %19 = arith.cmpi slt, %15, %18 : vector<16x1xi32>
    %20 = vector.broadcast %19 : vector<16x1xi1> to vector<16x128xi1>
    %21 = arith.andi %17, %20 : vector<16x128xi1>
    %22 = arith.divf %11, %9 : vector<16x128xf32>
    %23 = math.log %22 : vector<16x128xf32>
    %24 = arith.mulf %11, %23 : vector<16x128xf32>
    %cst_5 = arith.constant 0.000000e+00 : f32
    %25 = vector.broadcast %cst_5 : f32 to vector<16x128xf32>
    %26 = arith.select %21, %24, %25 : vector<16x128xi1>, vector<16x128xf32>
    %c0_6 = arith.constant 0 : index
    %c0_7 = arith.constant 0 : index
    %27 = vector.load %arg5[%c0_6, %c0_7] : memref<8x128xf32, #tpu.memory_space<vmem>>, vector<8x128xf32>
    %28 = vector.shape_cast %26 : vector<16x128xf32> to vector<2x8x128xf32>
    %cst_8 = arith.constant dense<0.000000e+00> : vector<8x128xf32>
    %29 = vector.multi_reduction <add>, %28, %cst_8 [0] : vector<2x8x128xf32> to vector<8x128xf32>
    %30 = arith.addf %27, %29 : vector<8x128xf32>
    %c0_9 = arith.constant 0 : index
    %c0_10 = arith.constant 0 : index
    %31 = vector.load %arg5[%c0_9, %c0_10] : memref<8x128xf32, #tpu.memory_space<vmem>>, vector<8x128xf32>
    tpu.vector_store %arg5[%c0_9, %c0_10], %30 {strides = array<i32>} : memref<8x128xf32, #tpu.memory_space<vmem>>, vector<8x128xf32>,
    %c1_i32_11 = arith.constant 1 : i32
    %c0_i32_12 = arith.constant 0 : i32
    %32 = arith.cmpi eq, %arg1, %c0_i32_12 : i32
    %33 = arith.extui %32 : i1 to i32
    %c0_i32_13 = arith.constant 0 : i32
    %34 = arith.cmpi ne, %33, %c0_i32_13 : i32
    scf.if %34 {
      %c0_14 = arith.constant 0 : index
      %c0_15 = arith.constant 0 : index
      %35 = vector.load %arg5[%c0_14, %c0_15] : memref<8x128xf32, #tpu.memory_space<vmem>>, vector<8x128xf32>
      %36 = vector.shape_cast %35 : vector<8x128xf32> to vector<1x8x128xf32>
      %cst_16 = arith.constant dense<0.000000e+00> : vector<1xf32>
      %37 = vector.multi_reduction <add>, %36, %cst_16 [1, 2] : vector<1x8x128xf32> to vector<1xf32>
      %38 = vector.shape_cast %37 : vector<1xf32> to vector<1x1x1xf32>
      %39 = vector.extract %38[0, 0, 0] : f32 from vector<1x1x1xf32>
      %40 = vector.broadcast %39 : f32 to vector<1x1xf32>
      %cst_17 = arith.constant 4.8828125E-4 : f32
      %41 = vector.broadcast %cst_17 : f32 to vector<1x1xf32>
      %42 = arith.mulf %40, %41 : vector<1x1xf32>
      %c0_18 = arith.constant 0 : index
      %c0_19 = arith.constant 0 : index
      %c0_20 = arith.constant 0 : index
      %43 = vector.load %arg4[%c0_18, %c0_19, %c0_20] : memref<1x1x1xf32, #tpu.memory_space<vmem>>, vector<1x1x1xf32>
      %44 = vector.shape_cast %43 : vector<1x1x1xf32> to vector<1x1xf32>
      %45 = vector.shape_cast %42 : vector<1x1xf32> to vector<1x1x1xf32>
      tpu.vector_store %arg4[%c0_18, %c0_19, %c0_20], %45 {strides = array<i32>} : memref<1x1x1xf32, #tpu.memory_space<vmem>>, vector<1x1x1xf32>,
    } else {
    }
    return
  }
  func.func @transform_0(%arg0: i32, %arg1: i32) -> (i32, i32) {
    %c1_i32 = arith.constant 1 : i32
    %0 = arith.muli %arg0, %c1_i32 : i32
    %1 = arith.addi %0, %arg1 : i32
    %c0_i32 = arith.constant 0 : i32
    %2 = arith.minsi %1, %c0_i32 : i32
    %c0_i32_0 = arith.constant 0 : i32
    %c0_i32_1 = arith.constant 0 : i32
    return %2, %c0_i32_0 : i32, i32
  }
  func.func @transform_1(%arg0: i32, %arg1: i32) -> (i32, i32) {
    %c1_i32 = arith.constant 1 : i32
    %0 = arith.muli %arg0, %c1_i32 : i32
    %1 = arith.addi %0, %arg1 : i32
    %c0_i32 = arith.constant 0 : i32
    %2 = arith.minsi %1, %c0_i32 : i32
    %c0_i32_0 = arith.constant 0 : i32
    %c0_i32_1 = arith.constant 0 : i32
    return %2, %c0_i32_0 : i32, i32
  }
  func.func @transform_2(%arg0: i32, %arg1: i32) -> (i32, i32, i32) {
    %c0_i32 = arith.constant 0 : i32
    %c0_i32_0 = arith.constant 0 : i32
    %c0_i32_1 = arith.constant 0 : i32
    return %arg0, %c0_i32, %c0_i32_0 : i32, i32, i32
  }
}

</mosaic_0001>

<llo_original>
// kernel: tpu_custom_call.1
$region0: #{tpu_custom_call.1}
  #allocation0 [shape = 'u32[]', space=smem, size = 0x4, offset = 0x4, fixed_abs, tag = 'smem constant byte address 0x4 - core index']
  #allocation1 [shape = 'u32[144,128]{1,0:T(1,128)}', space=vmem, size = 0x12000, scoped, tag = 'internal scratch']
  #allocation2 [shape = 'f32[8,128]{1,0:T(8,128)}', space=vmem, size = 0x1000, scoped, tag = 'scratch operand']
  %s0 = inlined_call_operand.hbm [shape: f32[16,128], index: 0, kind: input, shape index: {}]
  %s1 = inlined_call_operand.hbm [shape: f32[16,128], index: 1, kind: input, shape index: {}]
  %s2 = inlined_call_operand.vmem [shape: f32[2,1,1], index: 2, kind: output, shape index: {}]
  %s3 = sld [smem:[#allocation0]]
  $region57: #{tpu_custom_call.1} parent=0
    _
  %s5 = ssub.s32 1, %s3
  %s6 = scalar_select 0, %s5, %s3
  $region1: #{tpu_custom_call.1} parent=0
    #allocation3 [shape = 'u8[16384]{0}', space=vmem, size = 0x4000, scoped, tag = 'input window, operand 0']
    #allocation4 [shape = 's32[2]{0}', space=sflag, size = 0x8, scoped, tag = 'scoped memory for tpu_custom_call.1']
    #allocation5 [shape = 'u8[16384]{0}', space=vmem, size = 0x4000, scoped, tag = 'input window, operand 1']
    #allocation6 [shape = 's32[2]{0}', space=sflag, size = 0x8, scoped, tag = 'scoped memory for tpu_custom_call.1']
    %7 = vsyncpa [#allocation4], 0
    %s8 = scalar_lea.sflag [#allocation4], 1
    %9 = vsyncpa %s8, 0
    %10 = vsyncpa [#allocation6], 0
    %s11 = scalar_lea.sflag [#allocation6], 1
    %12 = vsyncpa %s11, 0
    loop: start=0, step=1, limit=4
    $region2: #{tpu_custom_call.1} parent=1 // loop_pre_header
      _
    $region3: #{tpu_custom_call.1} parent=1 // loop_header
      %s14 = sphi 0, %s18
      %p15 = scmp.ge.s32.totalorder %s14, 4
      %s21 = sphi 0, %s33
      %s22 = sphi 0, %s29
      %s23 = sphi 0, %s21
      %s24 = sphi 0, %s22
      %s25 = sphi 0, %s23
      %s26 = sphi 0, %s24
      %s42 = sphi 0, %s44
      %s45 = sphi 0, %s42
      %s46 = sphi 0, %s45
      %s62 = sphi 0, %s46
      %s74 = sphi 0, %s76
      %s77 = sphi 0, %s74
      %s78 = sphi 0, %s77
      %s94 = sphi 0, %s78
      %s100 = sphi 0, %s102
      %s103 = sphi 0, %s100
      %s104 = sphi 0, %s103
      %s120 = sphi 0, %s104
    $region4: #{tpu_custom_call.1} parent=1 // loop_header_branch
      %17 = sbr.rel (%p15) target = $region8
    $region5: #{tpu_custom_call.1} parent=1 // loop_body
      %s19 = ssub.s32 %s14, 1
      %s20 = ssub.s32 %s14, 2
      %s27 = sadd.s32 1, %s22
      %p28 = scmp.ge.s32.totalorder %s27, 1
      %s29 = scalar_select %p28, 0, %s27
      %s30 = sadd.s32 1, %s21
      %s31 = scalar_select %p28, %s30, %s21
      %p32 = scmp.ge.s32.totalorder %s31, 2
      %s33 = scalar_select %p32, 0, %s31
      %s34 = sadd.s32 %s21, %s22
      %p35 = scmp.lt.s32.totalorder %s34, 0
      %s36 = scalar_select %p35, %s34, 0
      %s37 = sadd.s32 %s33, %s29
      %p38 = scmp.lt.s32.totalorder %s37, 0
      %s39 = scalar_select %p38, %s37, 0
      %s40 = ssub.s32 %s36, %s39
      %p41 = scmp.eq.s32.totalorder %s40, 0
      %s43 = sadd.s32 %s42, 1
      %s44 = scalar_select %p41, %s42, %s43
      %p47 = pneg %p41
      %p48 = scmp.eq.s32.totalorder %s14, 1
      %p49 = por %p47, %p48
      %p50 = scmp.ne.s32.totalorder %s42, %s45
      %p51 = scmp.eq.s32.totalorder %s14, 0
      %p52 = por %p50, %p51
      %p53 = scmp.ne.s32.totalorder %s42, %s45
      %p54 = scmp.eq.s32.totalorder %s19, 1
      %p55 = por %p53, %p54
      %p56 = scmp.ne.s32.totalorder %s45, %s46
      %p57 = scmp.eq.s32.totalorder %s19, 0
      %p58 = por %p56, %p57
      %p59 = scmp.ne.s32.totalorder %s45, %s46
      %p60 = scmp.eq.s32.totalorder %s20, 1
      %p61 = por %p59, %p60
      %p63 = scmp.ne.s32.totalorder %s46, %s62
      %p64 = scmp.eq.s32.totalorder %s20, 0
      %p65 = por %p63, %p64
      %s66 = sadd.s32 %s21, %s22
      %p67 = scmp.lt.s32.totalorder %s66, 0
      %s68 = scalar_select %p67, %s66, 0
      %s69 = sadd.s32 %s33, %s29
      %p70 = scmp.lt.s32.totalorder %s69, 0
      %s71 = scalar_select %p70, %s69, 0
      %s72 = ssub.s32 %s68, %s71
      %p73 = scmp.eq.s32.totalorder %s72, 0
      %s75 = sadd.s32 %s74, 1
      %s76 = scalar_select %p73, %s74, %s75
      %p79 = pneg %p73
      %p80 = scmp.eq.s32.totalorder %s14, 1
      %p81 = por %p79, %p80
      %p82 = scmp.ne.s32.totalorder %s74, %s77
      %p83 = scmp.eq.s32.totalorder %s14, 0
      %p84 = por %p82, %p83
      %p85 = scmp.ne.s32.totalorder %s74, %s77
      %p86 = scmp.eq.s32.totalorder %s19, 1
      %p87 = por %p85, %p86
      %p88 = scmp.ne.s32.totalorder %s77, %s78
      %p89 = scmp.eq.s32.totalorder %s19, 0
      %p90 = por %p88, %p89
      %p91 = scmp.ne.s32.totalorder %s77, %s78
      %p92 = scmp.eq.s32.totalorder %s20, 1
      %p93 = por %p91, %p92
      %p95 = scmp.ne.s32.totalorder %s78, %s94
      %p96 = scmp.eq.s32.totalorder %s20, 0
      %p97 = por %p95, %p96
      %s98 = ssub.s32 %s21, %s33
      %p99 = scmp.eq.s32.totalorder %s98, 0
      %s101 = sadd.s32 %s100, 1
      %s102 = scalar_select %p99, %s100, %s101
      %p105 = pneg %p99
      %p106 = scmp.eq.s32.totalorder %s14, 1
      %p107 = por %p105, %p106
      %p108 = scmp.ne.s32.totalorder %s100, %s103
      %p109 = scmp.eq.s32.totalorder %s14, 0
      %p110 = por %p108, %p109
      %p111 = scmp.ne.s32.totalorder %s100, %s103
      %p112 = scmp.eq.s32.totalorder %s19, 1
      %p113 = por %p111, %p112
      %p114 = scmp.ne.s32.totalorder %s103, %s104
      %p115 = scmp.eq.s32.totalorder %s19, 0
      %p116 = por %p114, %p115
      %p117 = scmp.ne.s32.totalorder %s103, %s104
      %p118 = scmp.eq.s32.totalorder %s20, 1
      %p119 = por %p117, %p118
      %p121 = scmp.ne.s32.totalorder %s104, %s120
      %p122 = scmp.eq.s32.totalorder %s20, 0
      %p123 = por %p121, %p122
      %p124 = scmp.le.s32.totalorder 1, %s14
      %p125 = scmp.lt.s32.totalorder %s14, 3
      %p126 = pnand %p124, %p125
      %p127 = pneg %p126
      // Predicated region
      $region9: #{tpu_custom_call.1} parent=5 // pred_check
        _
      $region10: #{tpu_custom_call.1} parent=5 // pred_check_branch
        %129 = sbr.rel (%p126) target = $region12
      $region11: #{tpu_custom_call.1} parent=5 // pred_region
        %s130 = ssub.s32 %s14, 1
      $region12: #{tpu_custom_call.1} parent=5 // pred_fallthru
        _
      %p131 = scmp.lt.s32.totalorder %s14, 2
      // Predicated region
      $region13: #{tpu_custom_call.1} parent=5 // pred_check
        %p132 = pneg %p131
      $region14: #{tpu_custom_call.1} parent=5 // pred_check_branch
        %134 = sbr.rel (%p132) target = $region16
      $region15: #{tpu_custom_call.1} parent=5 // pred_region
        // Predicated region
        $region17: #{tpu_custom_call.1} parent=15 // pred_check
          %p135 = pneg %p52
        $region18: #{tpu_custom_call.1} parent=15 // pred_check_branch
          %137 = sbr.rel (%p135) target = $region20
        $region19: #{tpu_custom_call.1} parent=15 // pred_region
          %s138 = sand.u32 %s42, 1
          %s139 = scalar_lea.sflag [#allocation4], %s138
          %s140 = sand.u32 %s42, 1
          %s141 = smul.addr %s140, 16
          %s142 = scalar_lea.vmem [#allocation3], %s141
          %s143 = sadd.s32 %s21, %s22
          %p144 = scmp.lt.s32.totalorder %s143, 0
          %s145 = scalar_select %p144, %s143, 0
          %s146 = smul.u32 2, %s145
          %s148 = ssub.s32 256, 256
          %149 = vsyncadd %s139, %s148
          %s150 = smul.addr %s146, 128
          %s151 = scalar_lea.hbm %s0, %s150
          %s152 = sshll.u32 %s142, 4
          %s153 = int_to_ptr.vmem [resolvable:$true] %s152
          %158 = dma.hbm_to_vmem [thread:$0]  %s151, 256, %s153, %s139, 128, 128, 8
        $region20: #{tpu_custom_call.1} parent=15 // pred_fallthru
          _
        // Predicated region
        $region21: #{tpu_custom_call.1} parent=15 // pred_check
          %p159 = pneg %p84
        $region22: #{tpu_custom_call.1} parent=15 // pred_check_branch
          %161 = sbr.rel (%p159) target = $region24
        $region23: #{tpu_custom_call.1} parent=15 // pred_region
          %s162 = sand.u32 %s74, 1
          %s163 = scalar_lea.sflag [#allocation6], %s162
          %s164 = sand.u32 %s74, 1
          %s165 = smul.addr %s164, 16
          %s166 = scalar_lea.vmem [#allocation5], %s165
          %s167 = sadd.s32 %s21, %s22
          %p168 = scmp.lt.s32.totalorder %s167, 0
          %s169 = scalar_select %p168, %s167, 0
          %s170 = smul.u32 2, %s169
          %s172 = ssub.s32 256, 256
          %173 = vsyncadd %s163, %s172
          %s174 = smul.addr %s170, 128
          %s175 = scalar_lea.hbm %s1, %s174
          %s176 = sshll.u32 %s166, 4
          %s177 = int_to_ptr.vmem [resolvable:$true] %s176
          %182 = dma.hbm_to_vmem [thread:$0]  %s175, 256, %s177, %s163, 128, 128, 8
        $region24: #{tpu_custom_call.1} parent=15 // pred_fallthru
          _
      $region16: #{tpu_custom_call.1} parent=5 // pred_fallthru
        _
      %p183 = scmp.le.s32.totalorder 1, %s14
      %p184 = scmp.lt.s32.totalorder %s14, 3
      %p185 = pnand %p183, %p184
      %p186 = pneg %p185
      // Predicated region
      $region25: #{tpu_custom_call.1} parent=5 // pred_check
        _
      $region26: #{tpu_custom_call.1} parent=5 // pred_check_branch
        %188 = sbr.rel (%p185) target = $region28
      $region27: #{tpu_custom_call.1} parent=5 // pred_region
        %s189 = ssub.s32 %s14, 1
        %s190 = sand.u32 %s45, 1
        %s191 = scalar_lea.sflag [#allocation4], %s190
        %s192 = sand.u32 %s45, 1
        %s193 = smul.addr %s192, 16
        %s194 = scalar_lea.vmem [#allocation3], %s193
        // Predicated region
        $region29: #{tpu_custom_call.1} parent=27 // pred_check
          %p195 = pneg %p58
        $region30: #{tpu_custom_call.1} parent=27 // pred_check_branch
          %197 = sbr.rel (%p195) target = $region32
        $region31: #{tpu_custom_call.1} parent=27 // pred_region
          %198 = dma.done %s191, 256
        $region32: #{tpu_custom_call.1} parent=27 // pred_fallthru
          _
        %s199 = sand.u32 %s77, 1
        %s200 = scalar_lea.sflag [#allocation6], %s199
        %s201 = sand.u32 %s77, 1
        %s202 = smul.addr %s201, 16
        %s203 = scalar_lea.vmem [#allocation5], %s202
        // Predicated region
        $region33: #{tpu_custom_call.1} parent=27 // pred_check
          %p204 = pneg %p90
        $region34: #{tpu_custom_call.1} parent=27 // pred_check_branch
          %206 = sbr.rel (%p204) target = $region36
        $region35: #{tpu_custom_call.1} parent=27 // pred_region
          %207 = dma.done %s200, 256
        $region36: #{tpu_custom_call.1} parent=27 // pred_fallthru
          _
        %s208 = sand.u32 %s45, 1
        %s209 = scalar_lea.sflag [#allocation4], %s208
        %s210 = sand.u32 %s45, 1
        %s211 = smul.addr %s210, 16
        %s212 = scalar_lea.vmem [#allocation3], %s211
        %p213 = pneg %p58
        %p214 = pneg %p55
        %s215 = sand.u32 %s77, 1
        %s216 = scalar_lea.sflag [#allocation6], %s215
        %s217 = sand.u32 %s77, 1
        %s218 = smul.addr %s217, 16
        %s219 = scalar_lea.vmem [#allocation5], %s218
        %p220 = pneg %p90
        %p221 = pneg %p87
        %p222 = pneg %p116
        %p223 = pneg %p113
        %p224 = scmp.lt.s32.totalorder %s23, 1
        %s225 = scalar_select %p224, %s23, 1
        %s226 = scalar_lea.vmem %s2, %s225
        %s227 = sadd.s32 %s23, %s24
        %p228 = scmp.lt.s32.totalorder %s227, 0
        %s229 = scalar_select %p228, %s227, 0
        %s230 = smul.u32 2, %s229
        %s231 = sadd.s32 %s23, %s24
        %p232 = scmp.lt.s32.totalorder %s231, 0
        %s233 = scalar_select %p232, %s231, 0
        %s234 = smul.u32 2, %s233
        %p235 = scmp.lt.s32.totalorder %s23, 1
        %s236 = scalar_select %p235, %s23, 1
        %s237 = scalar_lea.vmem %s2, %s236
        %p238 = scmp.eq.s32.totalorder %s24, 0
        // Predicated region
        $region37: #{tpu_custom_call.1} parent=27 // pred_check
          %p239 = pneg %p238
        $region38: #{tpu_custom_call.1} parent=27 // pred_check_branch
          %241 = sbr.rel (%p239) target = $region40
        $region39: #{tpu_custom_call.1} parent=27 // pred_region
          %242 = vst [vmem:[#allocation2] sm:$0xff] 0.0
        $region40: #{tpu_custom_call.1} parent=27 // pred_fallthru
          _
        %s243 = sadd.s32 %s23, %s24
        %s244 = smul.u32 %s243, 16
        %v245 = vld [vmem:[%s194] sm:$0xff]
        %v246 = vld [vmem:[%s194 + $0x8] sm:$0xff]
        %v247 = vld [vmem:[%s203] sm:$0xff]
        %v248 = vld [vmem:[%s203 + $0x8] sm:$0xff]
        %s249 = sadd.s32 %s244, 0
        %v250 = vlaneseq
        %v251 = vshrl.u32 %v250, 7
        %v252 = vadd.s32 %v251, 8
        %v253 = vstv %s249
        %v254 = vadd.s32 %v253, %v251
        %v255 = vadd.s32 %v253, %v252
        %vm256 = vcmp.gt.f32.partialorder %v247, 0.0
        %vm257 = vcmp.gt.f32.partialorder %v248, 0.0
        %vm258 = vcmp.lt.s32.totalorder %v254, 16
        %vm259 = vcmp.lt.s32.totalorder %v255, 16
        %v260 = vsel %vm258, 1, 0
        %v261 = vsel %vm259, 1, 0
        %vm262 = vcmp.eq.s32.totalorder %v260, 1
        %vm263 = vcmp.eq.s32.totalorder %v261, 1
        %vm264 = vmand %vm256, %vm262
        %vm265 = vmand %vm257, %vm263
        %v266 = vrcp.pop %v245
        %v267 = vmul.f32 %v247, %v266
        %v268 = vrcp.pop %v246
        %v269 = vmul.f32 %v248, %v268
        %v270 = vlog2.pop %v267
        %v271 = vmul.f32 %v270, 0.6931472
        %v272 = vlog2.pop %v269
        %v273 = vmul.f32 %v272, 0.6931472
        %v274 = vmul.f32 %v247, %v271
        %v275 = vmul.f32 %v248, %v273
        %v276 = vsel %vm264, %v274, 0.0
        %v277 = vsel %vm265, %v275, 0.0
        %v278 = vld [vmem:[#allocation2] sm:$0xff]
        %v279 = vadd.f32 %v276, %v277
        %v280 = vadd.f32 %v278, %v279
        %281 = vst [vmem:[#allocation2] sm:$0xff] %v280
        // Predicated region
        $region41: #{tpu_custom_call.1} parent=27 // pred_check
          %p282 = pneg %p238
        $region42: #{tpu_custom_call.1} parent=27 // pred_check_branch
          %284 = sbr.rel (%p282) target = $region44
        $region43: #{tpu_custom_call.1} parent=27 // pred_region
          %v285 = vld [vmem:[#allocation2] sm:$0xff]
          %286 = vadd.xlane.f32.xlu0 %v285
          %v287 = vpop.xlane.xlu0 %286
          %v288 = vrot.slane %v287, 4
          %v289 = vadd.f32 %v287, %v288
          %v290 = vrot.slane %v289, 2
          %v291 = vadd.f32 %v289, %v290
          %v292 = vrot.slane %v291, 1
          %v293 = vadd.f32 %v291, %v292
          %s294 = vtos %v293
          %v295 = vstv %s294
          %v296 = vmul.f32 %v295, 0.00048828125
          %vm297 = vcmask 0
          %298 = vst.msk [vmem:[%s237] sm:$0x1] %vm297, %v296
        $region44: #{tpu_custom_call.1} parent=27 // pred_fallthru
          _
        %p299 = scmp.lt.s32.totalorder %s23, 1
        %s300 = scalar_select %p299, %s23, 1
        %s301 = scalar_lea.vmem %s2, %s300
        // Predicated region
        $region45: #{tpu_custom_call.1} parent=27 // pred_check
          %p302 = pneg %p113
        $region46: #{tpu_custom_call.1} parent=27 // pred_check_branch
          %304 = sbr.rel (%p302) target = $region48
        $region47: #{tpu_custom_call.1} parent=27 // pred_region
          _
        $region48: #{tpu_custom_call.1} parent=27 // pred_fallthru
          _
      $region28: #{tpu_custom_call.1} parent=5 // pred_fallthru
        _
      %p305 = scmp.le.s32.totalorder 2, %s14
      // Predicated region
      $region49: #{tpu_custom_call.1} parent=5 // pred_check
        %p306 = pneg %p305
      $region50: #{tpu_custom_call.1} parent=5 // pred_check_branch
        %308 = sbr.rel (%p306) target = $region52
      $region51: #{tpu_custom_call.1} parent=5 // pred_region
        %s309 = ssub.s32 %s14, 2
        // Predicated region
        $region53: #{tpu_custom_call.1} parent=51 // pred_check
          %p310 = pneg %p119
        $region54: #{tpu_custom_call.1} parent=51 // pred_check_branch
          %312 = sbr.rel (%p310) target = $region56
        $region55: #{tpu_custom_call.1} parent=51 // pred_region
          %p313 = scmp.lt.s32.totalorder %s25, 1
          %s314 = scalar_select %p313, %s25, 1
          %s315 = scalar_lea.vmem %s2, %s314
        $region56: #{tpu_custom_call.1} parent=51 // pred_fallthru
          _
      $region52: #{tpu_custom_call.1} parent=5 // pred_fallthru
        _
    $region6: #{tpu_custom_call.1} parent=1 // loop_footer
      %s18 = sadd.s32 1, %s14
    $region7: #{tpu_custom_call.1} parent=1 // loop_footer_branch
      %13 = sbr.rel target = $region3
    $region8: #{tpu_custom_call.1} parent=1 // loop_exit
      _
    %316 = vsyncpa [#allocation4], 1
    %s317 = scalar_lea.sflag [#allocation4], 1
    %318 = vsyncpa %s317, 1
    %319 = vsyncpa [#allocation6], 1
    %s320 = scalar_lea.sflag [#allocation6], 1
    %321 = vsyncpa %s320, 1

</llo_original>
